<compile_context>
chip_gen: v7x
topology: tpu7x:2x2x1
jax: 0.10.0
libtpu: 0.0.40
codegen_flags: <defaults>
</compile_context>

<pallas_src>
import functools
import math

import jax
import jax.numpy as jnp
from jax.experimental import pallas as pl
from jax.experimental.pallas import tpu as pltpu


def _round_up(n, m):
    return ((n + m - 1) // m) * m


def _dqn_kernel(x_ref, w1_ref, b1_ref, w2_ref, b2_ref, w3_ref, b3_ref, o_ref):
    """Fused 3-layer MLP forward on one batch tile.

    x arrives as f32 (TB, obs) and is cast to bf16 in-kernel; weights are bf16,
    lane-padded to 128; biases are f32 (1, 128). All matmuls accumulate in f32
    on the MXU; bias add + ReLU in f32. Only the real `act` columns of the
    final f32 accumulator are stored to HBM.
    """
    x = x_ref[...].astype(jnp.bfloat16)

    # Layer 1: Linear(obs -> 128pad) + ReLU
    h1 = jnp.dot(x, w1_ref[...], preferred_element_type=jnp.float32) + b1_ref[...]
    h1 = jnp.maximum(h1, 0.0).astype(jnp.bfloat16)

    # Layer 2: Linear(128pad -> 128pad) + ReLU
    h2 = jnp.dot(h1, w2_ref[...], preferred_element_type=jnp.float32) + b2_ref[...]
    h2 = jnp.maximum(h2, 0.0).astype(jnp.bfloat16)

    # Layer 3: Linear(128pad -> 128pad), no activation; store only real columns.
    q = jnp.dot(h2, w3_ref[...], preferred_element_type=jnp.float32) + b3_ref[...]
    act = o_ref.shape[1]
    o_ref[...] = q[:, :act].astype(o_ref.dtype)


def prepare_dqn_params(w1, b1, w2, b2, w3, b3):
    """One-time pad + bf16 cast of parameters (lane-dense, 128-padded).

    Padding is mathematically inert: padded hidden units get zero pre-activation
    and zero outgoing weights. Call once at setup, not per forward pass.
    """
    hidden = w1.shape[1]
    act = w3.shape[1]
    hpad = _round_up(hidden, 128)
    apad = _round_up(act, 128)

    w1p = jnp.pad(w1, ((0, 0), (0, hpad - hidden))).astype(jnp.bfloat16)
    b1p = jnp.pad(b1.reshape(1, -1), ((0, 0), (0, hpad - hidden))).astype(jnp.float32)
    w2p = jnp.pad(w2, ((0, hpad - hidden), (0, hpad - hidden))).astype(jnp.bfloat16)
    b2p = jnp.pad(b2.reshape(1, -1), ((0, 0), (0, hpad - hidden))).astype(jnp.float32)
    w3p = jnp.pad(w3, ((0, hpad - hidden), (0, apad - act))).astype(jnp.bfloat16)
    b3p = jnp.pad(b3.reshape(1, -1), ((0, 0), (0, apad - act))).astype(jnp.float32)
    return w1p, b1p, w2p, b2p, w3p, b3p


@functools.partial(jax.jit, static_argnames=("action_size", "block_batch"))
def dqn_forward(x, w1p, b1p, w2p, b2p, w3p, b3p, *, action_size, block_batch=8192):
    """y = relu(x@w1+b1) ... matching PyTorch semantics (weights stored (in,out)).

    Expects parameters already padded/cast by prepare_dqn_params.
    """
    batch, obs = x.shape
    hpad = w1p.shape[1]
    apad = w3p.shape[1]
    act = action_size

    # Batch tile: multiple of 16 (bf16 sublane packing), capped at block_batch.
    blk = max(16, (block_batch // 16) * 16)
    bp16 = _round_up(max(batch, 1), 16)
    tb = min(blk, bp16)
    # Megacore (v7x): guarantee >= 2 grid steps when the batch is big enough,
    # so ("parallel",) can shard the batch axis across both TensorCores.
    if bp16 >= 32 and bp16 // tb < 2:
        tb = _round_up((bp16 + 1) // 2, 16)

    bpad = _round_up(batch, tb)
    xp = x if bpad == batch else jnp.pad(x, ((0, bpad - batch), (0, 0)))

    grid = (bpad // tb,)

    flops = 2 * bpad * (obs * hpad + hpad * hpad + hpad * apad)
    bytes_accessed = (
        xp.size * 4                                  # f32 input
        + bpad * act * 4                             # f32 output (real width only)
        + (w1p.size + w2p.size + w3p.size) * 2       # bf16 weights
        + (b1p.size + b2p.size + b3p.size) * 4       # f32 biases
    )

    out = pl.pallas_call(
        _dqn_kernel,
        out_shape=jax.ShapeDtypeStruct((bpad, act), jnp.float32),
        grid=grid,
        in_specs=[
            pl.BlockSpec((tb, obs), lambda i: (i, 0)),        # x: tiled over batch
            pl.BlockSpec((obs, hpad), lambda i: (0, 0)),      # w1: VMEM-resident
            pl.BlockSpec((1, hpad), lambda i: (0, 0)),        # b1
            pl.BlockSpec((hpad, hpad), lambda i: (0, 0)),     # w2
            pl.BlockSpec((1, hpad), lambda i: (0, 0)),        # b2
            pl.BlockSpec((hpad, apad), lambda i: (0, 0)),     # w3
            pl.BlockSpec((1, apad), lambda i: (0, 0)),        # b3
        ],
        out_specs=pl.BlockSpec((tb, act), lambda i: (i, 0)),  # narrow HBM output
        compiler_params=pltpu.CompilerParams(
            dimension_semantics=("parallel",),
            vmem_limit_bytes=32 * 1024 * 1024,
        ),
        cost_estimate=pl.CostEstimate(
            flops=flops, transcendentals=0, bytes_accessed=bytes_accessed
        ),
    )(xp, w1p, b1p, w2p, b2p, w3p, b3p)

    # Strip batch padding (action dim is already unpadded).
    return out[:batch] if bpad != batch else out


def init_dqn_params(key, observation_size, action_size, hidden=64):
    """PyTorch nn.Linear default init (uniform +-1/sqrt(fan_in)).
    Weights stored as (in_features, out_features); bias as (1, out_features)."""
    keys = jax.random.split(key, 6)

    def linear(kw, kb, fan_in, fan_out):
        bound = 1.0 / math.sqrt(fan_in)
        w = jax.random.uniform(kw, (fan_in, fan_out), jnp.float32, -bound, bound)
        b = jax.random.uniform(kb, (1, fan_out), jnp.float32, -bound, bound)
        return w, b

    w1, b1 = linear(keys[0], keys[1], observation_size, hidden)
    w2, b2 = linear(keys[2], keys[3], hidden, hidden)
    w3, b3 = linear(keys[4], keys[5], hidden, action_size)
    return w1, b1, w2, b2, w3, b3


if __name__ == "__main__":
    observation_size = 8
    action_size = 4
    batch = 2

    key = jax.random.PRNGKey(0)
    k_params, k_x = jax.random.split(key)

    raw_params = init_dqn_params(k_params, observation_size, action_size)
    padded_params = prepare_dqn_params(*raw_params)   # one-time pad + bf16 cast
    x = jax.random.normal(k_x, (batch, observation_size), jnp.float32)

    out = dqn_forward(x, *padded_params, action_size=action_size)
    out = jax.block_until_ready(out)
    assert out.shape == (batch, action_size)

    # Reference with identical numerics (bf16 MXU inputs, f32 accumulation).
    w1, b1, w2, b2, w3, b3 = raw_params
    xb = x.astype(jnp.bfloat16)
    h1 = jnp.maximum(
        jnp.dot(xb, w1.astype(jnp.bfloat16), preferred_element_type=jnp.float32) + b1, 0.0
    ).astype(jnp.bfloat16)
    h2 = jnp.maximum(
        jnp.dot(h1, w2.astype(jnp.bfloat16), preferred_element_type=jnp.float32) + b2, 0.0
    ).astype(jnp.bfloat16)
    ref_bf16 = (
        jnp.dot(h2, w3.astype(jnp.bfloat16), preferred_element_type=jnp.float32) + b3
    )
    assert jnp.allclose(out, ref_bf16, atol=1e-2, rtol=1e-2), (out, ref_bf16)

    # Loose check against the full-f32 PyTorch-semantics forward.
    r1 = jnp.maximum(x @ w1 + b1, 0.0)
    r2 = jnp.maximum(r1 @ w2 + b2, 0.0)
    ref_f32 = r2 @ w3 + b3
    assert jnp.allclose(out, ref_f32, atol=5e-2, rtol=5e-2), (out, ref_f32)

    print("KERNEL_OK")
</pallas_src>

<mosaic_0001>
module attributes {stable_mosaic.version = 11 : i64} {
  func.func @_dqn_kernel(%arg0: i32, %arg1: memref<16x8xf32, #tpu.memory_space<vmem>>, %arg2: memref<8x128xbf16, #tpu.memory_space<vmem>>, %arg3: memref<1x128xf32, #tpu.memory_space<vmem>>, %arg4: memref<128x128xbf16, #tpu.memory_space<vmem>>, %arg5: memref<1x128xf32, #tpu.memory_space<vmem>>, %arg6: memref<128x128xbf16, #tpu.memory_space<vmem>>, %arg7: memref<1x128xf32, #tpu.memory_space<vmem>>, %arg8: memref<16x4xf32, #tpu.memory_space<vmem>>) attributes {dimension_semantics = [#tpu.dimension_semantics<parallel>], iteration_bounds = array<i64: 1>, scalar_prefetch = 0 : i64, scratch_operands = 0 : i64, tpu.core_type = #tpu.core_type<tc>, window_params = [{transform_indices = @transform_0, window_bounds = array<i64: 16, 8>}, {pipeline_mode = #tpu.pipeline_mode<synchronous>, transform_indices = @transform_1, window_bounds = array<i64: 8, 128>}, {pipeline_mode = #tpu.pipeline_mode<synchronous>, transform_indices = @transform_2, window_bounds = array<i64: 1, 128>}, {pipeline_mode = #tpu.pipeline_mode<synchronous>, transform_indices = @transform_3, window_bounds = array<i64: 128, 128>}, {pipeline_mode = #tpu.pipeline_mode<synchronous>, transform_indices = @transform_4, window_bounds = array<i64: 1, 128>}, {pipeline_mode = #tpu.pipeline_mode<synchronous>, transform_indices = @transform_5, window_bounds = array<i64: 128, 128>}, {pipeline_mode = #tpu.pipeline_mode<synchronous>, transform_indices = @transform_6, window_bounds = array<i64: 1, 128>}, {transform_indices = @transform_7, window_bounds = array<i64: 16, 4>}]} {
    %c0 = arith.constant 0 : index
    %c0_0 = arith.constant 0 : index
    %0 = vector.load %arg1[%c0, %c0_0] : memref<16x8xf32, #tpu.memory_space<vmem>>, vector<16x8xf32>
    %1 = arith.truncf %0 : vector<16x8xf32> to vector<16x8xbf16>
    %c0_1 = arith.constant 0 : index
    %c0_2 = arith.constant 0 : index
    %2 = vector.load %arg2[%c0_1, %c0_2] : memref<8x128xbf16, #tpu.memory_space<vmem>>, vector<8x128xbf16>
    %cst = arith.constant dense<0.000000e+00> : vector<16x128xf32>
    %3 = tpu.matmul %1, %2, %cst {dimension_numbers = #tpu.dot_dimension_numbers<[1], [0], [0], [1], [0, 0, 1, 1], [], []>} : vector<16x8xbf16>, vector<8x128xbf16>, vector<16x128xf32> -> vector<16x128xf32>
    %c0_3 = arith.constant 0 : index
    %c0_4 = arith.constant 0 : index
    %4 = vector.load %arg3[%c0_3, %c0_4] : memref<1x128xf32, #tpu.memory_space<vmem>>, vector<1x128xf32>
    %5 = vector.broadcast %4 : vector<1x128xf32> to vector<16x128xf32>
    %6 = arith.addf %3, %5 : vector<16x128xf32>
    %cst_5 = arith.constant 0.000000e+00 : f32
    %7 = vector.broadcast %cst_5 : f32 to vector<16x128xf32>
    %8 = arith.maximumf %6, %7 : vector<16x128xf32>
    %9 = arith.truncf %8 : vector<16x128xf32> to vector<16x128xbf16>
    %c0_6 = arith.constant 0 : index
    %c0_7 = arith.constant 0 : index
    %10 = vector.load %arg4[%c0_6, %c0_7] : memref<128x128xbf16, #tpu.memory_space<vmem>>, vector<128x128xbf16>
    %cst_8 = arith.constant dense<0.000000e+00> : vector<16x128xf32>
    %11 = tpu.matmul %9, %10, %cst_8 {dimension_numbers = #tpu.dot_dimension_numbers<[1], [0], [0], [1], [0, 0, 1, 1], [], []>} : vector<16x128xbf16>, vector<128x128xbf16>, vector<16x128xf32> -> vector<16x128xf32>
    %c0_9 = arith.constant 0 : index
    %c0_10 = arith.constant 0 : index
    %12 = vector.load %arg5[%c0_9, %c0_10] : memref<1x128xf32, #tpu.memory_space<vmem>>, vector<1x128xf32>
    %13 = vector.broadcast %12 : vector<1x128xf32> to vector<16x128xf32>
    %14 = arith.addf %11, %13 : vector<16x128xf32>
    %cst_11 = arith.constant 0.000000e+00 : f32
    %15 = vector.broadcast %cst_11 : f32 to vector<16x128xf32>
    %16 = arith.maximumf %14, %15 : vector<16x128xf32>
    %17 = arith.truncf %16 : vector<16x128xf32> to vector<16x128xbf16>
    %c0_12 = arith.constant 0 : index
    %c0_13 = arith.constant 0 : index
    %18 = vector.load %arg6[%c0_12, %c0_13] : memref<128x128xbf16, #tpu.memory_space<vmem>>, vector<128x128xbf16>
    %cst_14 = arith.constant dense<0.000000e+00> : vector<16x128xf32>
    %19 = tpu.matmul %17, %18, %cst_14 {dimension_numbers = #tpu.dot_dimension_numbers<[1], [0], [0], [1], [0, 0, 1, 1], [], []>} : vector<16x128xbf16>, vector<128x128xbf16>, vector<16x128xf32> -> vector<16x128xf32>
    %c0_15 = arith.constant 0 : index
    %c0_16 = arith.constant 0 : index
    %20 = vector.load %arg7[%c0_15, %c0_16] : memref<1x128xf32, #tpu.memory_space<vmem>>, vector<1x128xf32>
    %21 = vector.broadcast %20 : vector<1x128xf32> to vector<16x128xf32>
    %22 = arith.addf %19, %21 : vector<16x128xf32>
    %23 = vector.extract_strided_slice %22 {offsets = [0, 0], sizes = [16, 4], strides = [1, 1]} : vector<16x128xf32> to vector<16x4xf32>
    %c0_17 = arith.constant 0 : index
    %c0_18 = arith.constant 0 : index
    %24 = vector.load %arg8[%c0_17, %c0_18] : memref<16x4xf32, #tpu.memory_space<vmem>>, vector<16x4xf32>
    tpu.vector_store %arg8[%c0_17, %c0_18], %23 {strides = array<i32>} : memref<16x4xf32, #tpu.memory_space<vmem>>, vector<16x4xf32>,
    return
  }
  func.func @transform_0(%arg0: i32) -> (i32, i32) {
    %c0_i32 = arith.constant 0 : i32
    %c0_i32_0 = arith.constant 0 : i32
    return %arg0, %c0_i32 : i32, i32
  }
  func.func @transform_1(%arg0: i32) -> (i32, i32) {
    %c0_i32 = arith.constant 0 : i32
    %c0_i32_0 = arith.constant 0 : i32
    %c0_i32_1 = arith.constant 0 : i32
    return %c0_i32, %c0_i32_0 : i32, i32
  }
  func.func @transform_2(%arg0: i32) -> (i32, i32) {
    %c0_i32 = arith.constant 0 : i32
    %c0_i32_0 = arith.constant 0 : i32
    %c0_i32_1 = arith.constant 0 : i32
    return %c0_i32, %c0_i32_0 : i32, i32
  }
  func.func @transform_3(%arg0: i32) -> (i32, i32) {
    %c0_i32 = arith.constant 0 : i32
    %c0_i32_0 = arith.constant 0 : i32
    %c0_i32_1 = arith.constant 0 : i32
    return %c0_i32, %c0_i32_0 : i32, i32
  }
  func.func @transform_4(%arg0: i32) -> (i32, i32) {
    %c0_i32 = arith.constant 0 : i32
    %c0_i32_0 = arith.constant 0 : i32
    %c0_i32_1 = arith.constant 0 : i32
    return %c0_i32, %c0_i32_0 : i32, i32
  }
  func.func @transform_5(%arg0: i32) -> (i32, i32) {
    %c0_i32 = arith.constant 0 : i32
    %c0_i32_0 = arith.constant 0 : i32
    %c0_i32_1 = arith.constant 0 : i32
    return %c0_i32, %c0_i32_0 : i32, i32
  }
  func.func @transform_6(%arg0: i32) -> (i32, i32) {
    %c0_i32 = arith.constant 0 : i32
    %c0_i32_0 = arith.constant 0 : i32
    %c0_i32_1 = arith.constant 0 : i32
    return %c0_i32, %c0_i32_0 : i32, i32
  }
  func.func @transform_7(%arg0: i32) -> (i32, i32) {
    %c0_i32 = arith.constant 0 : i32
    %c0_i32_0 = arith.constant 0 : i32
    return %arg0, %c0_i32 : i32, i32
  }
}

</mosaic_0001>

<llo_original>
// kernel: dqn_forward.1
$region0: #{dqn_forward.1}
  #allocation0 [shape = 'u32[]', space=smem, size = 0x4, offset = 0x4, fixed_abs, tag = 'smem constant byte address 0x4 - core index']
  #allocation1 [shape = 'u32[144,128]{1,0:T(1,128)}', space=vmem, size = 0x12000, scoped, tag = 'internal scratch']
  %s0 = inlined_call_operand.vmem [shape: f32[16,8], index: 0, kind: input, shape index: {}]
  %s1 = inlined_call_operand.vmem [shape: bf16[8,128], index: 1, kind: input, shape index: {}]
  %s2 = inlined_call_operand.vmem [shape: f32[1,128], index: 2, kind: input, shape index: {}]
  %s3 = inlined_call_operand.hbm [shape: bf16[128,128], index: 3, kind: input, shape index: {}]
  %s4 = inlined_call_operand.vmem [shape: f32[1,128], index: 4, kind: input, shape index: {}]
  %s5 = inlined_call_operand.hbm [shape: bf16[128,128], index: 5, kind: input, shape index: {}]
  %s6 = inlined_call_operand.vmem [shape: f32[1,128], index: 6, kind: input, shape index: {}]
  %s7 = inlined_call_operand.vmem [shape: f32[16,4], index: 7, kind: output, shape index: {}]
  %s8 = sld [smem:[#allocation0]]
  $region46: #{dqn_forward.1} parent=0
    _
  %s10 = ssub.s32 1, %s8
  %s11 = scalar_select 0, %s10, %s8
  $region1: #{dqn_forward.1} parent=0
    #allocation2 [shape = 'u8[32768]{0}', space=vmem, size = 0x8000, scoped, tag = 'input window, operand 3, single buffered']
    #allocation3 [shape = 's32[1]{0}', space=sflag, size = 0x4, scoped, tag = 'scoped memory for dqn_forward.1']
    #allocation4 [shape = 'u8[32768]{0}', space=vmem, size = 0x8000, scoped, tag = 'input window, operand 5, single buffered']
    #allocation5 [shape = 's32[1]{0}', space=sflag, size = 0x4, scoped, tag = 'scoped memory for dqn_forward.1']
    %12 = vsyncpa [#allocation3], 0
    %13 = vsyncpa [#allocation5], 0
    // Predicated region
    $region2: #{dqn_forward.1} parent=1 // pred_check
      _
    $region3: #{dqn_forward.1} parent=1 // pred_check_branch
      %15 = sbr.rel (0) target = $region5
    $region4: #{dqn_forward.1} parent=1 // pred_region
      _
    $region5: #{dqn_forward.1} parent=1 // pred_fallthru
      _
    // Predicated region
    $region6: #{dqn_forward.1} parent=1 // pred_check
      _
    $region7: #{dqn_forward.1} parent=1 // pred_check_branch
      %17 = sbr.rel (0) target = $region9
    $region8: #{dqn_forward.1} parent=1 // pred_region
      _
    $region9: #{dqn_forward.1} parent=1 // pred_fallthru
      _
    // Predicated region
    $region10: #{dqn_forward.1} parent=1 // pred_check
      _
    $region11: #{dqn_forward.1} parent=1 // pred_check_branch
      %19 = sbr.rel (0) target = $region13
    $region12: #{dqn_forward.1} parent=1 // pred_region
      _
    $region13: #{dqn_forward.1} parent=1 // pred_fallthru
      _
    // Predicated region
    $region14: #{dqn_forward.1} parent=1 // pred_check
      _
    $region15: #{dqn_forward.1} parent=1 // pred_check_branch
      %21 = sbr.rel (0) target = $region17
    $region16: #{dqn_forward.1} parent=1 // pred_region
      %s23 = ssub.s32 1024, 1024
      %24 = vsyncadd [#allocation3], %s23
      %s25 = sshll.u32 [#allocation2], 4
      %s26 = int_to_ptr.vmem [resolvable:$true] %s25
      %31 = dma.hbm_to_vmem [thread:$0]  %s3, 1024, %s26, [#allocation3], 64, 64, 4
    $region17: #{dqn_forward.1} parent=1 // pred_fallthru
      _
    // Predicated region
    $region18: #{dqn_forward.1} parent=1 // pred_check
      _
    $region19: #{dqn_forward.1} parent=1 // pred_check_branch
      %33 = sbr.rel (0) target = $region21
    $region20: #{dqn_forward.1} parent=1 // pred_region
      _
    $region21: #{dqn_forward.1} parent=1 // pred_fallthru
      _
    // Predicated region
    $region22: #{dqn_forward.1} parent=1 // pred_check
      _
    $region23: #{dqn_forward.1} parent=1 // pred_check_branch
      %35 = sbr.rel (0) target = $region25
    $region24: #{dqn_forward.1} parent=1 // pred_region
      %s37 = ssub.s32 1024, 1024
      %38 = vsyncadd [#allocation5], %s37
      %s39 = sshll.u32 [#allocation4], 4
      %s40 = int_to_ptr.vmem [resolvable:$true] %s39
      %45 = dma.hbm_to_vmem [thread:$0]  %s5, 1024, %s40, [#allocation5], 64, 64, 4
    $region25: #{dqn_forward.1} parent=1 // pred_fallthru
      _
    // Predicated region
    $region26: #{dqn_forward.1} parent=1 // pred_check
      _
    $region27: #{dqn_forward.1} parent=1 // pred_check_branch
      %47 = sbr.rel (0) target = $region29
    $region28: #{dqn_forward.1} parent=1 // pred_region
      _
    $region29: #{dqn_forward.1} parent=1 // pred_fallthru
      _
    // Predicated region
    $region30: #{dqn_forward.1} parent=1 // pred_check
      _
    $region31: #{dqn_forward.1} parent=1 // pred_check_branch
      %49 = sbr.rel (0) target = $region33
    $region32: #{dqn_forward.1} parent=1 // pred_region
      %50 = dma.done [#allocation3], 1024
    $region33: #{dqn_forward.1} parent=1 // pred_fallthru
      _
    // Predicated region
    $region34: #{dqn_forward.1} parent=1 // pred_check
      _
    $region35: #{dqn_forward.1} parent=1 // pred_check_branch
      %52 = sbr.rel (0) target = $region37
    $region36: #{dqn_forward.1} parent=1 // pred_region
      %53 = dma.done [#allocation5], 1024
    $region37: #{dqn_forward.1} parent=1 // pred_fallthru
      _
    %v55 = vld [vmem:[%s0] sm:$0xff]
    %v56 = vld [vmem:[%s0 + $0x8] sm:$0xff]
    %v57 = vpack.c.bf16 %v56, %v55
    %v58 = vld [vmem:[%s1] sm:$0xf]
    %v59 = vld [vmem:[%s2] sm:$0x1]
    %v61 = vlaneseq
    %v62 = vshrl.u32 %v61, 7
    %v63 = vsub.s32 0, %v62
    %v64 = vrot.slane %v59, %v63
    %vm66 = vcmask 64512
    %v68 = vsel %vm66, %v57, 0
    %vm70 = vcmask 1043456
    %v72 = vsel %vm70, %v58, 0
    %74 = vmatprep.subr.bf16.mxu0 0
    %75 = vmatpush1.bf16.msra.mxu0 %v72
    %76 = vmatprep.subr.bf16.mxu0 0
    %77 = vmatpush1.bf16.msra.mxu0 0
    %78 = vmatprep.subr.bf16.mxu0 0
    %79 = vmatpush1.bf16.msra.mxu0 0
    %80 = vmatprep.subr.bf16.mxu0 0
    %81 = vmatpush1.bf16.msra.mxu0 0
    %82 = vmatprep.subr.bf16.mxu0 0
    %83 = vmatpush1.bf16.msra.mxu0 0
    %84 = vmatprep.subr.bf16.mxu0 0
    %85 = vmatpush1.bf16.msra.mxu0 0
    %86 = vmatprep.subr.bf16.mxu0 0
    %87 = vmatpush1.bf16.msra.mxu0 0
    %88 = vmatprep.subr.bf16.mxu0 0
    %89 = vmatpush1.bf16.msra.mxu0 0
    %90 = vmatprep.subr.bf16.mxu0 0
    %91 = vmatpush1.bf16.msra.mxu0 0
    %92 = vmatprep.subr.bf16.mxu0 0
    %93 = vmatpush1.bf16.msra.mxu0 0
    %94 = vmatprep.subr.bf16.mxu0 0
    %95 = vmatpush1.bf16.msra.mxu0 0
    %96 = vmatprep.subr.bf16.mxu0 0
    %97 = vmatpush1.bf16.msra.mxu0 0
    %98 = vmatprep.subr.bf16.mxu0 0
    %99 = vmatpush1.bf16.msra.mxu0 0
    %100 = vmatprep.subr.bf16.mxu0 0
    %101 = vmatpush1.bf16.msra.mxu0 0
    %102 = vmatprep.subr.bf16.mxu0 0
    %103 = vmatpush1.bf16.msra.mxu0 0
    %104 = vmatprep.subr.bf16.mxu0 0
    %105 = vmatpush1.bf16.msra.mxu0 0
    %106 = vmatprep.mubr.bf16.mxu0 0
    %107 = vmatmul.mubr.bf16.gmra.mrb[0].mxu0 %v68
    %v108 = vpop.f32.mrb[0].mxu0
    %v109 = vadd.f32 %v64, %v108
    %v110 = vpop.f32.mrb[0].mxu0
    %v111 = vpop.f32.mrb[0].mxu0
    %v112 = vadd.f32 %v64, %v111
    %v113 = vpop.f32.mrb[0].mxu0
    %114 = vdwg.mxu0
    %v115 = vmax.f32 %v109, 0.0
    %v116 = vmax.f32 %v112, 0.0
    %v117 = vpack.c.bf16 %v116, %v115
    %v118 = vld [vmem:[#allocation2] sm:$0xf]
    %v119 = vld [vmem:[#allocation2 + $0x4] sm:$0xf]
    %v120 = vld [vmem:[#allocation2 + $0x8] sm:$0xf]
    %v121 = vld [vmem:[#allocation2 + $0xc] sm:$0xf]
    %v122 = vld [vmem:[#allocation2 + $0x10] sm:$0xf]
    %v123 = vld [vmem:[#allocation2 + $0x14] sm:$0xf]
    %v124 = vld [vmem:[#allocation2 + $0x18] sm:$0xf]
    %v125 = vld [vmem:[#allocation2 + $0x1c] sm:$0xf]
    %v126 = vld [vmem:[#allocation2 + $0x20] sm:$0xf]
    %v127 = vld [vmem:[#allocation2 + $0x24] sm:$0xf]
    %v128 = vld [vmem:[#allocation2 + $0x28] sm:$0xf]
    %v129 = vld [vmem:[#allocation2 + $0x2c] sm:$0xf]
    %v130 = vld [vmem:[#allocation2 + $0x30] sm:$0xf]
    %v131 = vld [vmem:[#allocation2 + $0x34] sm:$0xf]
    %v132 = vld [vmem:[#allocation2 + $0x38] sm:$0xf]
    %v133 = vld [vmem:[#allocation2 + $0x3c] sm:$0xf]
    %v134 = vld [vmem:[%s4] sm:$0x1]
    %v136 = vlaneseq
    %v137 = vshrl.u32 %v136, 7
    %v138 = vsub.s32 0, %v137
    %v139 = vrot.slane %v134, %v138
    %v157 = vunpack.c.l.b16 %v118
    %v158 = vunpack.c.l.b16 %v119
    %v159 = vunpack.c.l.b16 %v120
    %v160 = vunpack.c.l.b16 %v121
    %v161 = vunpack.c.l.b16 %v122
    %v162 = vunpack.c.l.b16 %v123
    %v163 = vunpack.c.l.b16 %v124
    %v164 = vunpack.c.l.b16 %v125
    %v165 = vunpack.c.l.b16 %v126
    %v166 = vunpack.c.l.b16 %v127
    %v167 = vunpack.c.l.b16 %v128
    %v168 = vunpack.c.l.b16 %v129
    %v169 = vunpack.c.l.b16 %v130
    %v170 = vunpack.c.l.b16 %v131
    %v171 = vunpack.c.l.b16 %v132
    %v172 = vunpack.c.l.b16 %v133
    %v173 = vpack.c.b16 %v158, %v157
    %v174 = vpack.c.b16 %v160, %v159
    %v175 = vpack.c.b16 %v162, %v161
    %v176 = vpack.c.b16 %v164, %v163
    %v177 = vpack.c.b16 %v166, %v165
    %v178 = vpack.c.b16 %v168, %v167
    %v179 = vpack.c.b16 %v170, %v169
    %v180 = vpack.c.b16 %v172, %v171
    %189 = vmatprep.subr.bf16.mxu0 0
    %190 = vmatpush1.bf16.msra.mxu0 %v173
    %191 = vmatprep.subr.bf16.mxu0 0
    %192 = vmatpush1.bf16.msra.mxu0 %v174
    %193 = vmatprep.subr.bf16.mxu0 0
    %194 = vmatpush1.bf16.msra.mxu0 %v175
    %195 = vmatprep.subr.bf16.mxu0 0
    %196 = vmatpush1.bf16.msra.mxu0 %v176
    %197 = vmatprep.subr.bf16.mxu0 0
    %198 = vmatpush1.bf16.msra.mxu0 %v177
    %199 = vmatprep.subr.bf16.mxu0 0
    %200 = vmatpush1.bf16.msra.mxu0 %v178
    %201 = vmatprep.subr.bf16.mxu0 0
    %202 = vmatpush1.bf16.msra.mxu0 %v179
    %203 = vmatprep.subr.bf16.mxu0 0
    %204 = vmatpush1.bf16.msra.mxu0 %v180
    %205 = vmatprep.subr.bf16.mxu0 0
    %206 = vmatpush1.bf16.msra.mxu0 0
    %207 = vmatprep.subr.bf16.mxu0 0
    %208 = vmatpush1.bf16.msra.mxu0 0
    %209 = vmatprep.subr.bf16.mxu0 0
    %210 = vmatpush1.bf16.msra.mxu0 0
    %211 = vmatprep.subr.bf16.mxu0 0
    %212 = vmatpush1.bf16.msra.mxu0 0
    %213 = vmatprep.subr.bf16.mxu0 0
    %214 = vmatpush1.bf16.msra.mxu0 0
    %215 = vmatprep.subr.bf16.mxu0 0
    %216 = vmatpush1.bf16.msra.mxu0 0
    %217 = vmatprep.subr.bf16.mxu0 0
    %218 = vmatpush1.bf16.msra.mxu0 0
    %219 = vmatprep.subr.bf16.mxu0 0
    %220 = vmatpush1.bf16.msra.mxu0 0
    %221 = vmatprep.mubr.bf16.mxu0 0
    %222 = vmatmul.mubr.bf16.gmra.mrb[0].mxu0 %v117
    %v223 = vpop.f32.mrb[0].mxu0
    %v224 = vadd.f32 %v139, %v223
    %v225 = vpop.f32.mrb[0].mxu0
    %v226 = vpop.f32.mrb[0].mxu0
    %v227 = vadd.f32 %v139, %v226
    %v228 = vpop.f32.mrb[0].mxu0
    %229 = vdwg.mxu0
    %v230 = vmax.f32 %v224, 0.0
    %v231 = vmax.f32 %v227, 0.0
    %v232 = vpack.c.bf16 %v231, %v230
    %v233 = vld [vmem:[#allocation4] sm:$0xf]
    %v234 = vld [vmem:[#allocation4 + $0x4] sm:$0xf]
    %v235 = vld [vmem:[#allocation4 + $0x8] sm:$0xf]
    %v236 = vld [vmem:[#allocation4 + $0xc] sm:$0xf]
    %v237 = vld [vmem:[#allocation4 + $0x10] sm:$0xf]
    %v238 = vld [vmem:[#allocation4 + $0x14] sm:$0xf]
    %v239 = vld [vmem:[#allocation4 + $0x18] sm:$0xf]
    %v240 = vld [vmem:[#allocation4 + $0x1c] sm:$0xf]
    %v241 = vld [vmem:[#allocation4 + $0x20] sm:$0xf]
    %v242 = vld [vmem:[#allocation4 + $0x24] sm:$0xf]
    %v243 = vld [vmem:[#allocation4 + $0x28] sm:$0xf]
    %v244 = vld [vmem:[#allocation4 + $0x2c] sm:$0xf]
    %v245 = vld [vmem:[#allocation4 + $0x30] sm:$0xf]
    %v246 = vld [vmem:[#allocation4 + $0x34] sm:$0xf]
    %v247 = vld [vmem:[#allocation4 + $0x38] sm:$0xf]
    %v248 = vld [vmem:[#allocation4 + $0x3c] sm:$0xf]
    %v249 = vld [vmem:[%s6] sm:$0x1]
    %v251 = vlaneseq
    %v252 = vshrl.u32 %v251, 7
    %v253 = vsub.s32 0, %v252
    %v254 = vrot.slane %v249, %v253
    %v272 = vunpack.c.l.b16 %v233
    %v273 = vunpack.c.l.b16 %v234
    %v274 = vunpack.c.l.b16 %v235
    %v275 = vunpack.c.l.b16 %v236
    %v276 = vunpack.c.l.b16 %v237
    %v277 = vunpack.c.l.b16 %v238
    %v278 = vunpack.c.l.b16 %v239
    %v279 = vunpack.c.l.b16 %v240
    %v280 = vunpack.c.l.b16 %v241
    %v281 = vunpack.c.l.b16 %v242
    %v282 = vunpack.c.l.b16 %v243
    %v283 = vunpack.c.l.b16 %v244
    %v284 = vunpack.c.l.b16 %v245
    %v285 = vunpack.c.l.b16 %v246
    %v286 = vunpack.c.l.b16 %v247
    %v287 = vunpack.c.l.b16 %v248
    %v288 = vpack.c.b16 %v273, %v272
    %v289 = vpack.c.b16 %v275, %v274
    %v290 = vpack.c.b16 %v277, %v276
    %v291 = vpack.c.b16 %v279, %v278
    %v292 = vpack.c.b16 %v281, %v280
    %v293 = vpack.c.b16 %v283, %v282
    %v294 = vpack.c.b16 %v285, %v284
    %v295 = vpack.c.b16 %v287, %v286
    %304 = vmatprep.subr.bf16.mxu0 0
    %305 = vmatpush1.bf16.msra.mxu0 %v288
    %306 = vmatprep.subr.bf16.mxu0 0
    %307 = vmatpush1.bf16.msra.mxu0 %v289
    %308 = vmatprep.subr.bf16.mxu0 0
    %309 = vmatpush1.bf16.msra.mxu0 %v290
    %310 = vmatprep.subr.bf16.mxu0 0
    %311 = vmatpush1.bf16.msra.mxu0 %v291
    %312 = vmatprep.subr.bf16.mxu0 0
    %313 = vmatpush1.bf16.msra.mxu0 %v292
    %314 = vmatprep.subr.bf16.mxu0 0
    %315 = vmatpush1.bf16.msra.mxu0 %v293
    %316 = vmatprep.subr.bf16.mxu0 0
    %317 = vmatpush1.bf16.msra.mxu0 %v294
    %318 = vmatprep.subr.bf16.mxu0 0
    %319 = vmatpush1.bf16.msra.mxu0 %v295
    %320 = vmatprep.subr.bf16.mxu0 0
    %321 = vmatpush1.bf16.msra.mxu0 0
    %322 = vmatprep.subr.bf16.mxu0 0
    %323 = vmatpush1.bf16.msra.mxu0 0
    %324 = vmatprep.subr.bf16.mxu0 0
    %325 = vmatpush1.bf16.msra.mxu0 0
    %326 = vmatprep.subr.bf16.mxu0 0
    %327 = vmatpush1.bf16.msra.mxu0 0
    %328 = vmatprep.subr.bf16.mxu0 0
    %329 = vmatpush1.bf16.msra.mxu0 0
    %330 = vmatprep.subr.bf16.mxu0 0
    %331 = vmatpush1.bf16.msra.mxu0 0
    %332 = vmatprep.subr.bf16.mxu0 0
    %333 = vmatpush1.bf16.msra.mxu0 0
    %334 = vmatprep.subr.bf16.mxu0 0
    %335 = vmatpush1.bf16.msra.mxu0 0
    %336 = vmatprep.mubr.bf16.mxu0 0
    %337 = vmatmul.mubr.bf16.gmra.mrb[0].mxu0 %v232
    %v338 = vpop.f32.mrb[0].mxu0
    %v339 = vadd.f32 %v254, %v338
    %v340 = vpop.f32.mrb[0].mxu0
    %v341 = vpop.f32.mrb[0].mxu0
    %v342 = vadd.f32 %v254, %v341
    %v343 = vpop.f32.mrb[0].mxu0
    %344 = vdwg.mxu0
    %vm345 = vcmask 31744
    %346 = vst.msk [vmem:[%s7] sm:$0xff] %vm345, %v339
    %347 = vst.msk [vmem:[%s7 + $0x8] sm:$0xff] %vm345, %v342
    // Predicated region
    $region38: #{dqn_forward.1} parent=1 // pred_check
      _
    $region39: #{dqn_forward.1} parent=1 // pred_check_branch
      %349 = sbr.rel (0) target = $region41
    $region40: #{dqn_forward.1} parent=1 // pred_region
      _
    $region41: #{dqn_forward.1} parent=1 // pred_fallthru
      _
    // Predicated region
    $region42: #{dqn_forward.1} parent=1 // pred_check
      _
    $region43: #{dqn_forward.1} parent=1 // pred_check_branch
      %351 = sbr.rel (0) target = $region45
    $region44: #{dqn_forward.1} parent=1 // pred_region
      _
    $region45: #{dqn_forward.1} parent=1 // pred_fallthru
      _
    %352 = vsyncpa [#allocation3], 1
    %353 = vsyncpa [#allocation5], 1

</llo_original>
